<compile_context>
chip_gen: v5e
topology: v5e:2x2
jax: 0.10.0
libtpu: 0.0.40
codegen_flags: <defaults>
</compile_context>

<pallas_src>
import functools

import jax
import jax.numpy as jnp
from jax import lax
from jax.experimental import pallas as pl
from jax.experimental.pallas import tpu as pltpu


# ---------------------------------------------------------------------------
# Hardware-aware sizing helpers
# ---------------------------------------------------------------------------
@functools.lru_cache(maxsize=None)
def _vmem_capacity_bytes():
    """Physical VMEM of the current TPU generation (conservative fallback)."""
    try:
        cap = int(pltpu.get_tpu_info().vmem_capacity_bytes)
        if cap > 0:
            return cap
    except Exception:
        pass
    return 64 * 1024 * 1024  # v7x-sized fallback: safe on every generation


@functools.lru_cache(maxsize=None)
def _vmem_limit_bytes():
    """Scoped VMEM limit: 64 MiB on v5e/v6e (128 MiB physical), 32 MiB on v7x."""
    return int(min(64 * 1024 * 1024, _vmem_capacity_bytes() // 2))


@functools.lru_cache(maxsize=None)
def _default_k_splits():
    """Split the K reduction across both TensorCores on dual-TC chips (v7x)."""
    try:
        kind = jax.devices()[0].device_kind.lower()
    except Exception:
        return 1
    return 2 if "v7" in kind else 1


def _round_up(v, mult):
    return (v + mult - 1) // mult * mult


def _pick_tk(n, m, itemsize, *, max_tk=16384):
    """Largest 128-multiple K tile dividing m under the per-buffer VMEM budget.

    m must already be a multiple of 128 (features are zero-padded in the
    wrappers).  The tile is sized so that the double-buffered (n, tk) feature
    tile plus the resident (n, n) f32 Gram/target fit well inside the scoped
    VMEM limit of the current TPU generation.
    """
    assert m % 128 == 0
    limit = _vmem_limit_bytes()
    resident = 2 * n * n * 4  # resident Gram accumulator/output + target (f32)
    budget = max(limit // 2 - resident, 2 * 128 * n * itemsize)
    budget_tk = max(128, (budget // (2 * n * itemsize)) // 128 * 128)
    tk = max(128, min(m, budget_tk, max_tk))
    while m % tk != 0:  # terminates: m % 128 == 0
        tk -= 128
    return tk


def _prep_features(x, stream_dtype, k_multiple):
    """(a,b,c,d) -> (n, m_pad) feature slab, K zero-padded to `k_multiple`."""
    a, b, c, d = x.shape
    n, m = a * b, c * d
    feats = x.reshape(n, m)  # row-major, identical to torch.Tensor.view
    if stream_dtype is not None and feats.dtype != stream_dtype:
        feats = feats.astype(stream_dtype)  # e.g. bf16 streaming: halves HBM bytes
    m_pad = _round_up(m, k_multiple)
    if m_pad != m:
        # Zero columns do not change F @ F.T; `norm` below always uses the real m.
        feats = jnp.pad(feats, ((0, 0), (0, m_pad - m)))
    return feats, n, m


# ---------------------------------------------------------------------------
# Kernel 1: (partial) Gram matrix, accumulated directly in the resident output
#   grid = (num_k_splits [parallel], K steps [arbitrary])
#   out  = (num_k_splits, n, n) f32 partials, each already scaled by 1/norm
# ---------------------------------------------------------------------------
def _gram_partial_kernel(feat_ref, gram_ref, *, inv_norm):
    k = pl.program_id(1)

    @pl.when(k == 0)
    def _():
        gram_ref[...] = jnp.zeros_like(gram_ref)

    f = feat_ref[...]  # native / streamed dtype operand; f32 accumulate on MXU
    # Contract dim 1 of both operands: F @ F.T without materializing F.T.
    # TODO(synk): audit pl.lower_as_mlir for a per-step XLU vxpose on the RHS;
    # restructure to a (tk, n) staging scratch only if one shows up.
    gram_ref[...] += lax.dot_general(
        f, f, (((1,), (1,)), ((), ())), preferred_element_type=jnp.float32
    )

    @pl.when(k == pl.num_programs(1) - 1)
    def _():
        gram_ref[...] *= inv_norm


def _gram_partials(feats, n, m_real, *, block_k=None, num_k_splits=1):
    m_pad = feats.shape[1]
    per_split = m_pad // num_k_splits
    tk = block_k if block_k is not None else _pick_tk(n, per_split, feats.dtype.itemsize)
    assert per_split % tk == 0
    steps = per_split // tk
    inv_norm = 1.0 / float(n * m_real)
    cost = pl.CostEstimate(
        flops=2 * n * n * m_pad,
        transcendentals=0,
        bytes_accessed=n * m_pad * feats.dtype.itemsize + num_k_splits * n * n * 4,
    )
    return pl.pallas_call(
        functools.partial(_gram_partial_kernel, inv_norm=inv_norm),
        out_shape=jax.ShapeDtypeStruct((num_k_splits, n, n), jnp.float32),
        grid=(num_k_splits, steps),
        in_specs=[pl.BlockSpec((n, tk), lambda p, k: (0, p * steps + k))],
        out_specs=pl.BlockSpec((None, n, n), lambda p, k: (p, 0, 0)),
        compiler_params=pltpu.CompilerParams(
            dimension_semantics=("parallel", "arbitrary"),
            vmem_limit_bytes=_vmem_limit_bytes(),
        ),
        cost_estimate=cost,
    )(feats)


def gram_matrix(x, *, block_k=None, num_k_splits=None, stream_dtype=None):
    """G = F @ F.T / (a*b*c*d), F = x.reshape(a*b, c*d). Pallas, K-tiled."""
    if num_k_splits is None:
        num_k_splits = _default_k_splits()
    feats, n, m = _prep_features(x, stream_dtype, 128 * num_k_splits)
    partials = _gram_partials(feats, n, m, block_k=block_k, num_k_splits=num_k_splits)
    return partials[0] if num_k_splits == 1 else jnp.sum(partials, axis=0)


# ---------------------------------------------------------------------------
# Kernel 2: fused Gram + MSE-vs-target, scalar loss emitted to SMEM
#   (single-TensorCore path; the K reduction is one "arbitrary" grid axis)
# ---------------------------------------------------------------------------
def _gram_mse_kernel(feat_ref, tgt_ref, loss_ref, acc_ref, *, inv_norm):
    k = pl.program_id(0)

    @pl.when(k == 0)
    def _():
        acc_ref[...] = jnp.zeros_like(acc_ref)

    f = feat_ref[...]
    acc_ref[...] += lax.dot_general(
        f, f, (((1,), (1,)), ((), ())), preferred_element_type=jnp.float32
    )

    @pl.when(k == pl.num_programs(0) - 1)
    def _():
        diff = acc_ref[...] * inv_norm - tgt_ref[...].astype(jnp.float32)
        loss_ref[0] = jnp.sum(diff * diff) * (1.0 / float(diff.size))


def _fused_loss_call(feats, target_gram, n, m_real, tk, *, single_buffer_target):
    m_pad = feats.shape[1]
    steps = m_pad // tk
    inv_norm = 1.0 / float(n * m_real)
    tgt_kwargs = {}
    if single_buffer_target:
        # The target block index never changes -> one VMEM buffer is enough;
        # frees n*n*4 bytes for larger feature tiles (matters most on v7x).
        tgt_kwargs["pipeline_mode"] = pl.Buffered(1)
    cost = pl.CostEstimate(
        flops=2 * n * n * m_pad + 3 * n * n,
        transcendentals=0,
        bytes_accessed=n * m_pad * feats.dtype.itemsize + n * n * 4 + 4,
    )
    loss = pl.pallas_call(
        functools.partial(_gram_mse_kernel, inv_norm=inv_norm),
        out_shape=jax.ShapeDtypeStruct((1,), jnp.float32),
        grid=(steps,),
        in_specs=[
            pl.BlockSpec((n, tk), lambda k: (0, k)),
            pl.BlockSpec((n, n), lambda k: (0, 0), **tgt_kwargs),
        ],
        out_specs=pl.BlockSpec(memory_space=pltpu.SMEM),
        scratch_shapes=[pltpu.VMEM((n, n), jnp.float32)],
        compiler_params=pltpu.CompilerParams(
            dimension_semantics=("arbitrary",),
            vmem_limit_bytes=_vmem_limit_bytes(),
        ),
        cost_estimate=cost,
    )(feats, target_gram)
    return loss[0]


def _style_loss_impl(x, target_gram, *, block_k=None, num_k_splits=None,
                     stream_dtype=None):
    """mse_loss(gram_matrix(x), target_gram) with tuning knobs exposed."""
    if num_k_splits is None:
        num_k_splits = _default_k_splits()
    feats, n, m = _prep_features(x, stream_dtype, 128 * num_k_splits)

    if num_k_splits > 1:
        # Dual-TensorCore path (v7x): each core reduces half of K into its own
        # partial Gram (F is read exactly once); the tiny (n, n) sum + MSE
        # epilogue runs in plain XLA.
        partials = _gram_partials(feats, n, m, block_k=block_k,
                                  num_k_splits=num_k_splits)
        g = jnp.sum(partials, axis=0)
        diff = g - target_gram.astype(jnp.float32)
        return jnp.mean(diff * diff)

    tk = block_k if block_k is not None else _pick_tk(n, feats.shape[1],
                                                      feats.dtype.itemsize)
    assert feats.shape[1] % tk == 0
    try:
        return _fused_loss_call(feats, target_gram, n, m, tk,
                                single_buffer_target=True)
    except Exception:
        # Fallback for JAX builds where pipeline_mode=pl.Buffered(1) is rejected.
        return _fused_loss_call(feats, target_gram, n, m, tk,
                                single_buffer_target=False)


# ---------------------------------------------------------------------------
# Differentiable loss (custom VJP) — needed for the style-transfer optimization
# ---------------------------------------------------------------------------
@jax.custom_vjp
def style_loss_value(x, target_gram):
    return _style_loss_impl(x, target_gram)


def _style_loss_fwd(x, target_gram):
    return _style_loss_impl(x, target_gram), (x, target_gram)


def _style_loss_bwd(res, g):
    # L = mean((G - T)^2), G = F F^T / norm  =>
    #   dL/dG = 2 (G - T) / n^2 ,  dL/dF = (1/norm)(dL/dG + dL/dG^T) F
    # G is recomputed with the Pallas Gram kernel (flash-style rematerialization).
    x, target_gram = res
    a, b, c, d = x.shape
    n, m = a * b, c * d
    norm = float(n * m)
    feats = x.reshape(n, m).astype(jnp.float32)
    gram = gram_matrix(x)
    d_gram = (2.0 / float(n * n)) * (gram - target_gram.astype(jnp.float32))
    # TODO(synk): Pallas-ify this (n, n) @ (n, m) backward matmul (and fuse it
    # with the Gram recompute) for very large feature maps; plain XLA here.
    d_feats = ((d_gram + d_gram.T) @ feats) * (1.0 / norm)
    dx = (g * d_feats).reshape(x.shape).astype(x.dtype)
    d_target = (-g * d_gram).astype(target_gram.dtype)
    return dx, d_target


style_loss_value.defvjp(_style_loss_fwd, _style_loss_bwd)


# ---------------------------------------------------------------------------
# StyleLoss module equivalent
# ---------------------------------------------------------------------------
class StyleLoss:
    def __init__(self, target_feature):
        # Target Gram matrix computed once ("detached" constant).
        self.target = jax.lax.stop_gradient(gram_matrix(target_feature))
        self.loss = None

    def __call__(self, x):
        # NOTE: storing self.loss as a side effect mirrors the PyTorch module;
        # inside jax.jit prefer calling style_loss_value(x, target) directly.
        self.loss = style_loss_value(x, self.target)
        return x  # passthrough, exactly like the PyTorch module


# ---------------------------------------------------------------------------
# Reference (pure JAX) for correctness checks
# ---------------------------------------------------------------------------
def _gram_ref(x):
    a, b, c, d = x.shape
    f = x.reshape(a * b, c * d).astype(jnp.float32)
    return (f @ f.T) / (a * b * c * d)


def _loss_ref(x, target_feature):
    return jnp.mean((_gram_ref(x) - _gram_ref(target_feature)) ** 2)


if __name__ == "__main__":
    key = jax.random.PRNGKey(0)
    k_tgt, k_in = jax.random.split(key)

    # NCHW shapes consistent with a conv feature map: (a=2, b=4, c=16, d=16).
    target_feature = jax.random.normal(k_tgt, (2, 4, 16, 16), dtype=jnp.float32)
    x = jax.random.normal(k_in, (2, 4, 16, 16), dtype=jnp.float32)

    module = StyleLoss(target_feature)
    out = jax.block_until_ready(module(x))
    loss = jax.block_until_ready(module.loss)

    g_ref = _gram_ref(x)
    t_ref = _gram_ref(target_feature)
    loss_ref = jnp.mean((g_ref - t_ref) ** 2)

    assert jnp.allclose(out, x), "forward must return the input unchanged"
    assert jnp.allclose(module.target, t_ref, rtol=1e-5, atol=1e-5), "target gram mismatch"
    assert jnp.allclose(loss, loss_ref, rtol=1e-5, atol=1e-6), (loss, loss_ref)

    # Multi-step K-tiled accumulation and explicit dual-split (partial Gram) paths.
    loss_tiled = jax.block_until_ready(
        _style_loss_impl(x, module.target, block_k=128, num_k_splits=1))
    loss_split = jax.block_until_ready(
        _style_loss_impl(x, module.target, block_k=128, num_k_splits=2))
    assert jnp.allclose(loss_tiled, loss_ref, rtol=1e-5, atol=1e-6), (loss_tiled, loss_ref)
    assert jnp.allclose(loss_split, loss_ref, rtol=1e-5, atol=1e-6), (loss_split, loss_ref)

    # Non-128-multiple K (zero-padding path): 14x14 spatial -> m = 196.
    x_odd = jax.random.normal(k_in, (1, 4, 14, 14), dtype=jnp.float32)
    t_odd = jax.random.normal(k_tgt, (1, 4, 14, 14), dtype=jnp.float32)
    g_odd_tgt = jax.block_until_ready(gram_matrix(t_odd))
    loss_odd = jax.block_until_ready(style_loss_value(x_odd, g_odd_tgt))
    assert jnp.allclose(g_odd_tgt, _gram_ref(t_odd), rtol=1e-5, atol=1e-5)
    assert jnp.allclose(loss_odd, _loss_ref(x_odd, t_odd), rtol=1e-5, atol=1e-6)

    # bf16 feature streaming (halves HBM bytes): tolerance is looser by design.
    loss_bf16 = jax.block_until_ready(
        _style_loss_impl(x, module.target, stream_dtype=jnp.bfloat16, num_k_splits=1))
    assert jnp.allclose(loss_bf16, loss_ref, rtol=5e-2, atol=1e-6), (loss_bf16, loss_ref)

    # Gradient (custom VJP) vs autodiff of the plain-JAX reference.
    grad_pallas = jax.block_until_ready(jax.grad(style_loss_value)(x, module.target))
    grad_ref = jax.grad(lambda xx: _loss_ref(xx, target_feature))(x)
    assert jnp.allclose(grad_pallas, grad_ref, rtol=1e-4, atol=1e-8), "grad mismatch"

    print("KERNEL_OK")
</pallas_src>

<mosaic_0001>
module attributes {stable_mosaic.version = 11 : i64} {
  func.func @_gram_partial_kernel(%arg0: i32, %arg1: i32, %arg2: memref<8x256xf32, #tpu.memory_space<vmem>>, %arg3: memref<1x8x8xf32, #tpu.memory_space<vmem>>) attributes {dimension_semantics = [#tpu.dimension_semantics<parallel>, #tpu.dimension_semantics<arbitrary>], iteration_bounds = array<i64: 1, 1>, scalar_prefetch = 0 : i64, scratch_operands = 0 : i64, tpu.core_type = #tpu.core_type<tc>, window_params = [{transform_indices = @transform_0, window_bounds = array<i64: 8, 256>}, {transform_indices = @transform_1, window_bounds = array<i64: 1, 8, 8>}]} {
    %c0_i32 = arith.constant 0 : i32
    %0 = arith.cmpi eq, %arg1, %c0_i32 : i32
    %1 = arith.extui %0 : i1 to i32
    %c0_i32_0 = arith.constant 0 : i32
    %2 = arith.cmpi ne, %1, %c0_i32_0 : i32
    scf.if %2 {
      %cst_10 = arith.constant 0.000000e+00 : f32
      %14 = vector.broadcast %cst_10 : f32 to vector<8x8xf32>
      %c0_11 = arith.constant 0 : index
      %c0_12 = arith.constant 0 : index
      %c0_13 = arith.constant 0 : index
      %15 = vector.load %arg3[%c0_11, %c0_12, %c0_13] : memref<1x8x8xf32, #tpu.memory_space<vmem>>, vector<1x8x8xf32>
      %16 = vector.shape_cast %15 : vector<1x8x8xf32> to vector<8x8xf32>
      %17 = vector.shape_cast %14 : vector<8x8xf32> to vector<1x8x8xf32>
      tpu.vector_store %arg3[%c0_11, %c0_12, %c0_13], %17 {strides = array<i32>} : memref<1x8x8xf32, #tpu.memory_space<vmem>>, vector<1x8x8xf32>,
    } else {
    }
    %c0 = arith.constant 0 : index
    %c0_1 = arith.constant 0 : index
    %3 = vector.load %arg2[%c0, %c0_1] : memref<8x256xf32, #tpu.memory_space<vmem>>, vector<8x256xf32>
    %c0_2 = arith.constant 0 : index
    %c0_3 = arith.constant 0 : index
    %c0_4 = arith.constant 0 : index
    %4 = vector.load %arg3[%c0_2, %c0_3, %c0_4] : memref<1x8x8xf32, #tpu.memory_space<vmem>>, vector<1x8x8xf32>
    %5 = vector.shape_cast %4 : vector<1x8x8xf32> to vector<8x8xf32>
    %cst = arith.constant dense<0.000000e+00> : vector<8x8xf32>
    %6 = tpu.matmul %3, %3, %cst {dimension_numbers = #tpu.dot_dimension_numbers<[1], [1], [0], [0], [0, 0, 1, 0], [], []>} : vector<8x256xf32>, vector<8x256xf32>, vector<8x8xf32> -> vector<8x8xf32>
    %7 = arith.addf %5, %6 : vector<8x8xf32>
    %c0_5 = arith.constant 0 : index
    %c0_6 = arith.constant 0 : index
    %c0_7 = arith.constant 0 : index
    %8 = vector.load %arg3[%c0_5, %c0_6, %c0_7] : memref<1x8x8xf32, #tpu.memory_space<vmem>>, vector<1x8x8xf32>
    %9 = vector.shape_cast %8 : vector<1x8x8xf32> to vector<8x8xf32>
    %10 = vector.shape_cast %7 : vector<8x8xf32> to vector<1x8x8xf32>
    tpu.vector_store %arg3[%c0_5, %c0_6, %c0_7], %10 {strides = array<i32>} : memref<1x8x8xf32, #tpu.memory_space<vmem>>, vector<1x8x8xf32>,
    %c0_i32_8 = arith.constant 0 : i32
    %11 = arith.cmpi eq, %arg1, %c0_i32_8 : i32
    %12 = arith.extui %11 : i1 to i32
    %c0_i32_9 = arith.constant 0 : i32
    %13 = arith.cmpi ne, %12, %c0_i32_9 : i32
    scf.if %13 {
      %c0_10 = arith.constant 0 : index
      %c0_11 = arith.constant 0 : index
      %c0_12 = arith.constant 0 : index
      %14 = vector.load %arg3[%c0_10, %c0_11, %c0_12] : memref<1x8x8xf32, #tpu.memory_space<vmem>>, vector<1x8x8xf32>
      %15 = vector.shape_cast %14 : vector<1x8x8xf32> to vector<8x8xf32>
      %cst_13 = arith.constant 4.8828125E-4 : f32
      %16 = vector.broadcast %cst_13 : f32 to vector<8x8xf32>
      %17 = arith.mulf %15, %16 : vector<8x8xf32>
      %c0_14 = arith.constant 0 : index
      %c0_15 = arith.constant 0 : index
      %c0_16 = arith.constant 0 : index
      %18 = vector.load %arg3[%c0_14, %c0_15, %c0_16] : memref<1x8x8xf32, #tpu.memory_space<vmem>>, vector<1x8x8xf32>
      %19 = vector.shape_cast %18 : vector<1x8x8xf32> to vector<8x8xf32>
      %20 = vector.shape_cast %17 : vector<8x8xf32> to vector<1x8x8xf32>
      tpu.vector_store %arg3[%c0_14, %c0_15, %c0_16], %20 {strides = array<i32>} : memref<1x8x8xf32, #tpu.memory_space<vmem>>, vector<1x8x8xf32>,
    } else {
    }
    return
  }
  func.func @transform_0(%arg0: i32, %arg1: i32) -> (i32, i32) {
    %c1_i32 = arith.constant 1 : i32
    %0 = arith.muli %arg0, %c1_i32 : i32
    %1 = arith.addi %0, %arg1 : i32
    %c0_i32 = arith.constant 0 : i32
    %c0_i32_0 = arith.constant 0 : i32
    return %c0_i32, %1 : i32, i32
  }
  func.func @transform_1(%arg0: i32, %arg1: i32) -> (i32, i32, i32) {
    %c0_i32 = arith.constant 0 : i32
    %c0_i32_0 = arith.constant 0 : i32
    %c0_i32_1 = arith.constant 0 : i32
    return %arg0, %c0_i32, %c0_i32_0 : i32, i32, i32
  }
}

</mosaic_0001>

<llo_original>
// kernel: tpu_custom_call.1
$region0: #{tpu_custom_call.1}
  #allocation0 [shape = 'u32[]', space=smem, size = 0x4, offset = 0x4, fixed_abs, tag = 'smem constant byte address 0x4 - core index']
  #allocation1 [shape = 'u32[72,128]{1,0:T(1,128)}', space=vmem, size = 0x9000, scoped, tag = 'internal scratch']
  %s0 = inlined_call_operand.hbm [shape: f32[8,256], index: 0, kind: input, shape index: {}]
  %s1 = inlined_call_operand.hbm [shape: f32[1,8,8], index: 1, kind: output, shape index: {}]
  %s2 = sld [smem:[#allocation0]]
  $region26: #{tpu_custom_call.1} parent=0
    _
  %s4 = ssub.s32 1, %s2
  %s5 = scalar_select 0, %s4, %s2
  $region1: #{tpu_custom_call.1} parent=0
    #allocation2 [shape = 'u8[8192]{0}', space=vmem, size = 0x2000, scoped, tag = 'input window, operand 0, single buffered']
    #allocation3 [shape = 's32[1]{0}', space=sflag, size = 0x4, scoped, tag = 'scoped memory for tpu_custom_call.1']
    #allocation4 [shape = 's32[1]{0}', space=sflag, size = 0x4, scoped, tag = 'scoped memory for tpu_custom_call.1']
    #allocation5 [shape = 'u8[4096]{0}', space=vmem, size = 0x1000, scoped, tag = 'output window, operand 0, single buffered']
    %6 = vsyncpa [#allocation3], 0
    %7 = vsyncpa [#allocation4], 0
    // Predicated region
    $region2: #{tpu_custom_call.1} parent=1 // pred_check
      _
    $region3: #{tpu_custom_call.1} parent=1 // pred_check_branch
      %9 = sbr.rel (0) target = $region5
    $region4: #{tpu_custom_call.1} parent=1 // pred_region
      %s10 = sadd.s32 0, 0
      %s11 = smul.u32 2, %s10
      %13 = vsyncadd [#allocation3], 0
      %s14 = smul.addr %s11, 8
      %s15 = scalar_lea.hbm %s0, %s14
      %s17 = sshll.u32 %s15, 4
      %s18 = int_to_ptr.hbm [resolvable:$true] %s17
      %s19 = sshll.u32 [#allocation2], 4
      %s20 = int_to_ptr.vmem [resolvable:$true] %s19
      %22 = dma.hbm_to_vmem [thread:$0]  %s18, 256, %s20, [#allocation3]
    $region5: #{tpu_custom_call.1} parent=1 // pred_fallthru
      _
    // Predicated region
    $region6: #{tpu_custom_call.1} parent=1 // pred_check
      _
    $region7: #{tpu_custom_call.1} parent=1 // pred_check_branch
      %24 = sbr.rel (0) target = $region9
    $region8: #{tpu_custom_call.1} parent=1 // pred_region
      %26 = dma.done [#allocation3], 256
    $region9: #{tpu_custom_call.1} parent=1 // pred_fallthru
      _
    %s27 = sadd.s32 0, 0
    %s28 = smul.u32 2, %s27
    %p29 = scmp.eq.s32.totalorder 0, 0
    // Predicated region
    $region10: #{tpu_custom_call.1} parent=1 // pred_check
      %p30 = pneg %p29
    $region11: #{tpu_custom_call.1} parent=1 // pred_check_branch
      %32 = sbr.rel (%p30) target = $region13
    $region12: #{tpu_custom_call.1} parent=1 // pred_region
      %vm33 = vcmask 64512
      %34 = vst.msk [vmem:[#allocation5] sm:$0xff] %vm33, 0.0
    $region13: #{tpu_custom_call.1} parent=1 // pred_fallthru
      _
    %v35 = vld [vmem:[#allocation2] sm:$0xff]
    %v36 = vld [vmem:[#allocation2 + $0x8] sm:$0xff]
    %v37 = vld [vmem:[#allocation5] sm:$0xff]
    %38 = vmatpush.xpose.msra.mxu0 0.0
    %39 = vmatpush.xpose.msra.mxu0 0.0
    %40 = vmatpush.xpose.msra.mxu0 0.0
    %41 = vmatpush.xpose.msra.mxu0 0.0
    %42 = vmatpush.xpose.msra.mxu0 0.0
    %43 = vmatpush.xpose.msra.mxu0 0.0
    %44 = vmatpush.xpose.msra.mxu0 0.0
    %45 = vmatpush.xpose.msra.mxu0 0.0
    %46 = vmatpush.xpose.msra.mxu0 0.0
    %47 = vmatpush.xpose.msra.mxu0 0.0
    %48 = vmatpush.xpose.msra.mxu0 0.0
    %49 = vmatpush.xpose.msra.mxu0 0.0
    %50 = vmatpush.xpose.msra.mxu0 0.0
    %51 = vmatpush.xpose.msra.mxu0 0.0
    %52 = vmatpush.xpose.msra.mxu0 0.0
    %53 = vmatpush.xpose.msra.mxu0 %v35
    %54 = vmatmul.f32.gmra.mxu0 %v35
    %v55 = vpop.f32.mrf.mxu0
    %v56 = vadd.f32 0.0, %v55
    %57 = vdwg.mxu0
    %58 = vmatpush.xpose.msra.mxu0 0.0
    %59 = vmatpush.xpose.msra.mxu0 0.0
    %60 = vmatpush.xpose.msra.mxu0 0.0
    %61 = vmatpush.xpose.msra.mxu0 0.0
    %62 = vmatpush.xpose.msra.mxu0 0.0
    %63 = vmatpush.xpose.msra.mxu0 0.0
    %64 = vmatpush.xpose.msra.mxu0 0.0
    %65 = vmatpush.xpose.msra.mxu0 0.0
    %66 = vmatpush.xpose.msra.mxu0 0.0
    %67 = vmatpush.xpose.msra.mxu0 0.0
    %68 = vmatpush.xpose.msra.mxu0 0.0
    %69 = vmatpush.xpose.msra.mxu0 0.0
    %70 = vmatpush.xpose.msra.mxu0 0.0
    %71 = vmatpush.xpose.msra.mxu0 0.0
    %72 = vmatpush.xpose.msra.mxu0 0.0
    %73 = vmatpush.xpose.msra.mxu0 %v36
    %74 = vmatmul.f32.gmra.mxu0 %v36
    %v75 = vpop.f32.mrf.mxu0
    %v76 = vadd.f32 %v56, %v75
    %77 = vdwg.mxu0
    %v78 = vadd.f32 %v37, %v76
    %vm79 = vcmask 64512
    %80 = vst.msk [vmem:[#allocation5] sm:$0xff] %vm79, %v78
    // Predicated region
    $region14: #{tpu_custom_call.1} parent=1 // pred_check
      %p81 = pneg %p29
    $region15: #{tpu_custom_call.1} parent=1 // pred_check_branch
      %83 = sbr.rel (%p81) target = $region17
    $region16: #{tpu_custom_call.1} parent=1 // pred_region
      %v84 = vld [vmem:[#allocation5] sm:$0xff]
      %v85 = vmul.f32 %v84, 0.00048828125
      %86 = vst.msk [vmem:[#allocation5] sm:$0xff] %vm79, %v85
    $region17: #{tpu_custom_call.1} parent=1 // pred_fallthru
      _
    // Predicated region
    $region18: #{tpu_custom_call.1} parent=1 // pred_check
      _
    $region19: #{tpu_custom_call.1} parent=1 // pred_check_branch
      %88 = sbr.rel (0) target = $region21
    $region20: #{tpu_custom_call.1} parent=1 // pred_region
      %90 = vsyncadd [#allocation4], 0
      %s92 = sshll.u32 [#allocation5], 4
      %s93 = int_to_ptr.vmem [resolvable:$true] %s92
      %s94 = sshll.u32 %s1, 4
      %s95 = int_to_ptr.hbm [resolvable:$true] %s94
      %97 = dma.vmem_to_hbm [thread:$0]  %s93, 128, %s95, [#allocation4]
    $region21: #{tpu_custom_call.1} parent=1 // pred_fallthru
      _
    // Predicated region
    $region22: #{tpu_custom_call.1} parent=1 // pred_check
      _
    $region23: #{tpu_custom_call.1} parent=1 // pred_check_branch
      %99 = sbr.rel (0) target = $region25
    $region24: #{tpu_custom_call.1} parent=1 // pred_region
      %101 = dma.done [#allocation4], 128
    $region25: #{tpu_custom_call.1} parent=1 // pred_fallthru
      _
    %102 = vsyncpa [#allocation3], 1
    %103 = vsyncpa [#allocation4], 1

</llo_original>
